<compile_context>
chip_gen: v7x
topology: tpu7x:2x2x1
jax: 0.10.0
libtpu: 0.0.40
codegen_flags: <defaults>
</compile_context>

<pallas_src>
import functools

import jax
import jax.numpy as jnp
from jax import lax
from jax.experimental import pallas as pl
from jax.experimental.pallas import tpu as pltpu


def _round_up(x, m):
    return ((x + m - 1) // m) * m


def _clustering_kernel(x_ref, c_ref, csq_ref, q_ref, *, alpha, n_valid):
    # x_ref: (TN, D), c_ref: (K_pad, D), csq_ref: (1, K_pad), q_ref: (TN, K_pad)
    x = x_ref[...]
    c = c_ref[...]

    xf = x.astype(jnp.float32)
    x_sq = jnp.sum(xf * xf, axis=1, keepdims=True)                     # (TN, 1)
    c_sq = csq_ref[...].astype(jnp.float32)                            # (1, K_pad)

    # MXU matmul, contraction on D of both operands (no explicit transpose of c).
    xc = lax.dot_general(
        x, c,
        dimension_numbers=(((1,), (1,)), ((), ())),
        preferred_element_type=jnp.float32,
    )                                                                  # (TN, K_pad)

    # ||x - c||^2, clamped against fp32 cancellation.
    dist = jnp.maximum(x_sq + c_sq - 2.0 * xc, 0.0)                    # (TN, K_pad)

    # Student's t-kernel:  q = alpha / (alpha + dist)  ==  1 / (1 + dist/alpha)
    q = alpha * pl.reciprocal(alpha + dist, approx=False)
    power = (alpha + 1.0) / 2.0
    if power != 1.0:
        q = q ** power

    # Zero out padded cluster columns before the row-sum / store.
    col = lax.broadcasted_iota(jnp.int32, q.shape, 1)
    q = jnp.where(col < n_valid, q, 0.0)

    # Row normalization: EUP approx reciprocal + one Newton step (keeps |row_sum-1| < 1e-5).
    q_sum = jnp.sum(q, axis=1, keepdims=True)                          # (TN, 1)
    inv = pl.reciprocal(q_sum, approx=True)
    inv = inv * (2.0 - q_sum * inv)
    q_ref[...] = (q * inv).astype(q_ref.dtype)


def clustering_forward(embeddings, cluster_centers, alpha=1.0, block_n=None):
    """Soft cluster assignment q: [N, K]."""
    N, D = embeddings.shape
    K, D2 = cluster_centers.shape
    assert D == D2, "embedding dim mismatch"

    # Lane-dense K: pad cluster axis to a multiple of 128.
    K_pad = _round_up(max(K, 1), 128)

    # Large N tile (multiple of 8); single block for small N.  For huge D on v7x (64 MiB
    # VMEM) budget: 2*block_n*D*4 + K_pad*D*4 + 2*block_n*K_pad*4 bytes must fit.
    if block_n is None:
        block_n = min(1024, _round_up(N, 8))
    block_n = _round_up(block_n, 8)
    N_pad = _round_up(N, block_n)

    x = embeddings
    if N_pad != N:
        x = jnp.pad(x, ((0, N_pad - N), (0, 0)))
    c = cluster_centers
    if K_pad != K:
        c = jnp.pad(c, ((0, K_pad - K), (0, 0)))

    # Grid-invariant center norms, computed once outside the kernel.  (1, K_pad)
    c_sq = jnp.sum(c.astype(jnp.float32) * c.astype(jnp.float32), axis=1)[None, :]

    kernel = functools.partial(_clustering_kernel, alpha=float(alpha), n_valid=int(K))

    q_pad = pl.pallas_call(
        kernel,
        out_shape=jax.ShapeDtypeStruct((N_pad, K_pad), jnp.float32),
        grid_spec=pltpu.PrefetchScalarGridSpec(
            num_scalar_prefetch=0,
            grid=(N_pad // block_n,),
            in_specs=[
                pl.BlockSpec((block_n, D), lambda i: (i, 0)),   # embeddings tile
                pl.BlockSpec((K_pad, D), lambda i: (0, 0)),     # all cluster centers (resident)
                pl.BlockSpec((1, K_pad), lambda i: (0, 0)),     # precomputed ||c||^2 (resident)
            ],
            out_specs=pl.BlockSpec((block_n, K_pad), lambda i: (i, 0)),
        ),
        compiler_params=pltpu.CompilerParams(
            dimension_semantics=("parallel",),
        ),
    )(x, c, c_sq)

    return q_pad[:N, :K]


def _reference(embeddings, cluster_centers, alpha=1.0):
    diff = embeddings[:, None, :] - cluster_centers[None, :, :]
    dist = jnp.sum(diff * diff, axis=2)
    q = 1.0 / (1.0 + dist / alpha)
    q = q ** ((alpha + 1.0) / 2.0)
    return q / jnp.sum(q, axis=1, keepdims=True)


if __name__ == "__main__":
    # Module hyper-parameters (small, consistent with the PyTorch module).
    embedding_dim = 32
    n_clusters = 6
    alpha = 1.0
    N = 256  # number of node embeddings

    key = jax.random.PRNGKey(0)
    k_emb, k_ctr = jax.random.split(key)

    # Node embeddings [N, embedding_dim].
    embeddings = jax.random.normal(k_emb, (N, embedding_dim), dtype=jnp.float32)

    # Deterministic xavier_uniform-style init of cluster_centers [n_clusters, embedding_dim].
    bound = (6.0 / (n_clusters + embedding_dim)) ** 0.5
    cluster_centers = jax.random.uniform(
        k_ctr, (n_clusters, embedding_dim), dtype=jnp.float32,
        minval=-bound, maxval=bound)

    q = clustering_forward(embeddings, cluster_centers, alpha=alpha)
    q = jax.block_until_ready(q)

    q_ref = _reference(embeddings, cluster_centers, alpha=alpha)
    assert q.shape == (N, n_clusters)
    assert jnp.allclose(q, q_ref, rtol=1e-4, atol=1e-5), "mismatch vs reference"
    # Rows of q sum to 1.
    assert jnp.allclose(jnp.sum(q, axis=1), jnp.ones((N,)), rtol=1e-5, atol=1e-5)

    print("KERNEL_OK")
</pallas_src>

<mosaic_0001>
module attributes {stable_mosaic.version = 11 : i64} {
  func.func @_clustering_kernel(%arg0: i32, %arg1: memref<256x32xf32, #tpu.memory_space<vmem>>, %arg2: memref<128x32xf32, #tpu.memory_space<vmem>>, %arg3: memref<1x128xf32, #tpu.memory_space<vmem>>, %arg4: memref<256x128xf32, #tpu.memory_space<vmem>>) attributes {dimension_semantics = [#tpu.dimension_semantics<parallel>], iteration_bounds = array<i64: 1>, scalar_prefetch = 0 : i64, scratch_operands = 0 : i64, tpu.core_type = #tpu.core_type<tc>, window_params = [{transform_indices = @transform_0, window_bounds = array<i64: 256, 32>}, {pipeline_mode = #tpu.pipeline_mode<synchronous>, transform_indices = @transform_1, window_bounds = array<i64: 128, 32>}, {pipeline_mode = #tpu.pipeline_mode<synchronous>, transform_indices = @transform_2, window_bounds = array<i64: 1, 128>}, {transform_indices = @transform_3, window_bounds = array<i64: 256, 128>}]} {
    %c0 = arith.constant 0 : index
    %c0_0 = arith.constant 0 : index
    %0 = vector.load %arg1[%c0, %c0_0] : memref<256x32xf32, #tpu.memory_space<vmem>>, vector<256x32xf32>
    %c0_1 = arith.constant 0 : index
    %c0_2 = arith.constant 0 : index
    %1 = vector.load %arg2[%c0_1, %c0_2] : memref<128x32xf32, #tpu.memory_space<vmem>>, vector<128x32xf32>
    %2 = arith.mulf %0, %0 : vector<256x32xf32>
    %cst = arith.constant dense<0.000000e+00> : vector<256xf32>
    %3 = vector.multi_reduction <add>, %2, %cst [1] : vector<256x32xf32> to vector<256xf32>
    %4 = vector.shape_cast %3 : vector<256xf32> to vector<256x1xf32>
    %c0_3 = arith.constant 0 : index
    %c0_4 = arith.constant 0 : index
    %5 = vector.load %arg3[%c0_3, %c0_4] : memref<1x128xf32, #tpu.memory_space<vmem>>, vector<1x128xf32>
    %cst_5 = arith.constant dense<0.000000e+00> : vector<256x128xf32>
    %6 = tpu.matmul %0, %1, %cst_5 {dimension_numbers = #tpu.dot_dimension_numbers<[1], [1], [0], [0], [0, 0, 1, 0], [], []>} : vector<256x32xf32>, vector<128x32xf32>, vector<256x128xf32> -> vector<256x128xf32>
    %7 = vector.broadcast %4 : vector<256x1xf32> to vector<256x128xf32>
    %8 = vector.broadcast %5 : vector<1x128xf32> to vector<256x128xf32>
    %9 = arith.addf %7, %8 : vector<256x128xf32>
    %cst_6 = arith.constant 2.000000e+00 : f32
    %10 = vector.broadcast %cst_6 : f32 to vector<256x128xf32>
    %11 = arith.mulf %10, %6 : vector<256x128xf32>
    %12 = arith.subf %9, %11 : vector<256x128xf32>
    %cst_7 = arith.constant 0.000000e+00 : f32
    %13 = vector.broadcast %cst_7 : f32 to vector<256x128xf32>
    %14 = arith.maximumf %12, %13 : vector<256x128xf32>
    %cst_8 = arith.constant 1.000000e+00 : f32
    %15 = vector.broadcast %cst_8 : f32 to vector<256x128xf32>
    %16 = arith.addf %15, %14 : vector<256x128xf32>
    %17 = tpu.reciprocal %16 : vector<256x128xf32> -> vector<256x128xf32>
    %cst_9 = arith.constant 1.000000e+00 : f32
    %18 = vector.broadcast %cst_9 : f32 to vector<256x128xf32>
    %19 = arith.mulf %18, %17 : vector<256x128xf32>
    %20 = tpu.iota {dimensions = array<i32: 1>} : vector<256x128xi32>
    %c6_i32 = arith.constant 6 : i32
    %21 = vector.broadcast %c6_i32 : i32 to vector<256x128xi32>
    %22 = arith.cmpi slt, %20, %21 : vector<256x128xi32>
    %cst_10 = arith.constant 0.000000e+00 : f32
    %23 = vector.broadcast %cst_10 : f32 to vector<256x128xf32>
    %24 = arith.select %22, %19, %23 : vector<256x128xi1>, vector<256x128xf32>
    %cst_11 = arith.constant dense<0.000000e+00> : vector<256xf32>
    %25 = vector.multi_reduction <add>, %24, %cst_11 [1] : vector<256x128xf32> to vector<256xf32>
    %26 = vector.shape_cast %25 : vector<256xf32> to vector<256x1xf32>
    %27 = tpu.reciprocal %26 {approx = true} : vector<256x1xf32> -> vector<256x1xf32>
    %28 = arith.mulf %26, %27 : vector<256x1xf32>
    %cst_12 = arith.constant 2.000000e+00 : f32
    %29 = vector.broadcast %cst_12 : f32 to vector<256x1xf32>
    %30 = arith.subf %29, %28 : vector<256x1xf32>
    %31 = arith.mulf %27, %30 : vector<256x1xf32>
    %32 = vector.broadcast %31 : vector<256x1xf32> to vector<256x128xf32>
    %33 = arith.mulf %24, %32 : vector<256x128xf32>
    %c0_13 = arith.constant 0 : index
    %c0_14 = arith.constant 0 : index
    %34 = vector.load %arg4[%c0_13, %c0_14] : memref<256x128xf32, #tpu.memory_space<vmem>>, vector<256x128xf32>
    tpu.vector_store %arg4[%c0_13, %c0_14], %33 {strides = array<i32>} : memref<256x128xf32, #tpu.memory_space<vmem>>, vector<256x128xf32>,
    return
  }
  func.func @transform_0(%arg0: i32) -> (i32, i32) {
    %c0_i32 = arith.constant 0 : i32
    %c0_i32_0 = arith.constant 0 : i32
    return %arg0, %c0_i32 : i32, i32
  }
  func.func @transform_1(%arg0: i32) -> (i32, i32) {
    %c0_i32 = arith.constant 0 : i32
    %c0_i32_0 = arith.constant 0 : i32
    %c0_i32_1 = arith.constant 0 : i32
    return %c0_i32, %c0_i32_0 : i32, i32
  }
  func.func @transform_2(%arg0: i32) -> (i32, i32) {
    %c0_i32 = arith.constant 0 : i32
    %c0_i32_0 = arith.constant 0 : i32
    %c0_i32_1 = arith.constant 0 : i32
    return %c0_i32, %c0_i32_0 : i32, i32
  }
  func.func @transform_3(%arg0: i32) -> (i32, i32) {
    %c0_i32 = arith.constant 0 : i32
    %c0_i32_0 = arith.constant 0 : i32
    return %arg0, %c0_i32 : i32, i32
  }
}

</mosaic_0001>

<llo_original>
// kernel: tpu_custom_call.1
$region0: #{tpu_custom_call.1}
  #allocation0 [shape = 'u32[]', space=smem, size = 0x4, offset = 0x4, fixed_abs, tag = 'smem constant byte address 0x4 - core index']
  #allocation1 [shape = 'u32[144,128]{1,0:T(1,128)}', space=vmem, size = 0x12000, scoped, tag = 'internal scratch']
  %s0 = inlined_call_operand.vmem [shape: f32[256,32], index: 0, kind: input, shape index: {}]
  %s1 = inlined_call_operand.vmem [shape: f32[128,32], index: 1, kind: input, shape index: {}]
  %s2 = inlined_call_operand.vmem [shape: f32[1,128], index: 2, kind: input, shape index: {}]
  %s3 = inlined_call_operand.hbm [shape: f32[256,128], index: 3, kind: output, shape index: {}]
  %s4 = sld [smem:[#allocation0]]
  $region22: #{tpu_custom_call.1} parent=0
    _
  %s6 = ssub.s32 1, %s4
  %s7 = scalar_select 0, %s6, %s4
  $region1: #{tpu_custom_call.1} parent=0
    #allocation2 [shape = 'u8[131072]{0}', space=vmem, size = 0x20000, scoped, tag = 'output window, operand 0, single buffered']
    #allocation3 [shape = 's32[1]{0}', space=sflag, size = 0x4, scoped, tag = 'scoped memory for tpu_custom_call.1']
    %8 = vsyncpa [#allocation3], 0
    // Predicated region
    $region2: #{tpu_custom_call.1} parent=1 // pred_check
      _
    $region3: #{tpu_custom_call.1} parent=1 // pred_check_branch
      %10 = sbr.rel (0) target = $region5
    $region4: #{tpu_custom_call.1} parent=1 // pred_region
      _
    $region5: #{tpu_custom_call.1} parent=1 // pred_fallthru
      _
    // Predicated region
    $region6: #{tpu_custom_call.1} parent=1 // pred_check
      _
    $region7: #{tpu_custom_call.1} parent=1 // pred_check_branch
      %12 = sbr.rel (0) target = $region9
    $region8: #{tpu_custom_call.1} parent=1 // pred_region
      _
    $region9: #{tpu_custom_call.1} parent=1 // pred_fallthru
      _
    // Predicated region
    $region10: #{tpu_custom_call.1} parent=1 // pred_check
      _
    $region11: #{tpu_custom_call.1} parent=1 // pred_check_branch
      %14 = sbr.rel (0) target = $region13
    $region12: #{tpu_custom_call.1} parent=1 // pred_region
      _
    $region13: #{tpu_custom_call.1} parent=1 // pred_fallthru
      _
    %v15 = vld [vmem:[%s0] sm:$0xff]
    %v16 = vld [vmem:[%s0 + $0x8] sm:$0xff]
    %v17 = vld [vmem:[%s0 + $0x10] sm:$0xff]
    %v18 = vld [vmem:[%s0 + $0x18] sm:$0xff]
    %v19 = vld [vmem:[%s0 + $0x20] sm:$0xff]
    %v20 = vld [vmem:[%s0 + $0x28] sm:$0xff]
    %v21 = vld [vmem:[%s0 + $0x30] sm:$0xff]
    %v22 = vld [vmem:[%s0 + $0x38] sm:$0xff]
    %v23 = vld [vmem:[%s0 + $0x40] sm:$0xff]
    %v24 = vld [vmem:[%s0 + $0x48] sm:$0xff]
    %v25 = vld [vmem:[%s0 + $0x50] sm:$0xff]
    %v26 = vld [vmem:[%s0 + $0x58] sm:$0xff]
    %v27 = vld [vmem:[%s0 + $0x60] sm:$0xff]
    %v28 = vld [vmem:[%s0 + $0x68] sm:$0xff]
    %v29 = vld [vmem:[%s0 + $0x70] sm:$0xff]
    %v30 = vld [vmem:[%s0 + $0x78] sm:$0xff]
    %v31 = vld [vmem:[%s0 + $0x80] sm:$0xff]
    %v32 = vld [vmem:[%s0 + $0x88] sm:$0xff]
    %v33 = vld [vmem:[%s0 + $0x90] sm:$0xff]
    %v34 = vld [vmem:[%s0 + $0x98] sm:$0xff]
    %v35 = vld [vmem:[%s0 + $0xa0] sm:$0xff]
    %v36 = vld [vmem:[%s0 + $0xa8] sm:$0xff]
    %v37 = vld [vmem:[%s0 + $0xb0] sm:$0xff]
    %v38 = vld [vmem:[%s0 + $0xb8] sm:$0xff]
    %v39 = vld [vmem:[%s0 + $0xc0] sm:$0xff]
    %v40 = vld [vmem:[%s0 + $0xc8] sm:$0xff]
    %v41 = vld [vmem:[%s0 + $0xd0] sm:$0xff]
    %v42 = vld [vmem:[%s0 + $0xd8] sm:$0xff]
    %v43 = vld [vmem:[%s0 + $0xe0] sm:$0xff]
    %v44 = vld [vmem:[%s0 + $0xe8] sm:$0xff]
    %v45 = vld [vmem:[%s0 + $0xf0] sm:$0xff]
    %v46 = vld [vmem:[%s0 + $0xf8] sm:$0xff]
    %v47 = vld [vmem:[%s1] sm:$0xff]
    %v48 = vld [vmem:[%s1 + $0x8] sm:$0xff]
    %v49 = vld [vmem:[%s1 + $0x10] sm:$0xff]
    %v50 = vld [vmem:[%s1 + $0x18] sm:$0xff]
    %v51 = vld [vmem:[%s1 + $0x20] sm:$0xff]
    %v52 = vld [vmem:[%s1 + $0x28] sm:$0xff]
    %v53 = vld [vmem:[%s1 + $0x30] sm:$0xff]
    %v54 = vld [vmem:[%s1 + $0x38] sm:$0xff]
    %v55 = vld [vmem:[%s1 + $0x40] sm:$0xff]
    %v56 = vld [vmem:[%s1 + $0x48] sm:$0xff]
    %v57 = vld [vmem:[%s1 + $0x50] sm:$0xff]
    %v58 = vld [vmem:[%s1 + $0x58] sm:$0xff]
    %v59 = vld [vmem:[%s1 + $0x60] sm:$0xff]
    %v60 = vld [vmem:[%s1 + $0x68] sm:$0xff]
    %v61 = vld [vmem:[%s1 + $0x70] sm:$0xff]
    %v62 = vld [vmem:[%s1 + $0x78] sm:$0xff]
    %v63 = vmul.f32 %v15, %v15
    %v64 = vmul.f32 %v16, %v16
    %v65 = vmul.f32 %v17, %v17
    %v66 = vmul.f32 %v18, %v18
    %v67 = vmul.f32 %v19, %v19
    %v68 = vmul.f32 %v20, %v20
    %v69 = vmul.f32 %v21, %v21
    %v70 = vmul.f32 %v22, %v22
    %v71 = vmul.f32 %v23, %v23
    %v72 = vmul.f32 %v24, %v24
    %v73 = vmul.f32 %v25, %v25
    %v74 = vmul.f32 %v26, %v26
    %v75 = vmul.f32 %v27, %v27
    %v76 = vmul.f32 %v28, %v28
    %v77 = vmul.f32 %v29, %v29
    %v78 = vmul.f32 %v30, %v30
    %v79 = vmul.f32 %v31, %v31
    %v80 = vmul.f32 %v32, %v32
    %v81 = vmul.f32 %v33, %v33
    %v82 = vmul.f32 %v34, %v34
    %v83 = vmul.f32 %v35, %v35
    %v84 = vmul.f32 %v36, %v36
    %v85 = vmul.f32 %v37, %v37
    %v86 = vmul.f32 %v38, %v38
    %v87 = vmul.f32 %v39, %v39
    %v88 = vmul.f32 %v40, %v40
    %v89 = vmul.f32 %v41, %v41
    %v90 = vmul.f32 %v42, %v42
    %v91 = vmul.f32 %v43, %v43
    %v92 = vmul.f32 %v44, %v44
    %v93 = vmul.f32 %v45, %v45
    %v94 = vmul.f32 %v46, %v46
    %vm95 = vcmask 261120
    %v96 = vsel %vm95, %v63, 0.0
    %97 = vadd.xlane.f32.xlu0 %v96
    %v98 = vpop.xlane.xlu0 %97
    %v99 = vsel %vm95, %v64, 0.0
    %100 = vadd.xlane.f32.xlu0 %v99
    %v101 = vpop.xlane.xlu0 %100
    %v102 = vsel %vm95, %v65, 0.0
    %103 = vadd.xlane.f32.xlu0 %v102
    %v104 = vpop.xlane.xlu0 %103
    %v105 = vsel %vm95, %v66, 0.0
    %106 = vadd.xlane.f32.xlu0 %v105
    %v107 = vpop.xlane.xlu0 %106
    %v108 = vsel %vm95, %v67, 0.0
    %109 = vadd.xlane.f32.xlu0 %v108
    %v110 = vpop.xlane.xlu0 %109
    %v111 = vsel %vm95, %v68, 0.0
    %112 = vadd.xlane.f32.xlu0 %v111
    %v113 = vpop.xlane.xlu0 %112
    %v114 = vsel %vm95, %v69, 0.0
    %115 = vadd.xlane.f32.xlu0 %v114
    %v116 = vpop.xlane.xlu0 %115
    %v117 = vsel %vm95, %v70, 0.0
    %118 = vadd.xlane.f32.xlu0 %v117
    %v119 = vpop.xlane.xlu0 %118
    %v120 = vsel %vm95, %v71, 0.0
    %121 = vadd.xlane.f32.xlu0 %v120
    %v122 = vpop.xlane.xlu0 %121
    %v123 = vsel %vm95, %v72, 0.0
    %124 = vadd.xlane.f32.xlu0 %v123
    %v125 = vpop.xlane.xlu0 %124
    %v126 = vsel %vm95, %v73, 0.0
    %127 = vadd.xlane.f32.xlu0 %v126
    %v128 = vpop.xlane.xlu0 %127
    %v129 = vsel %vm95, %v74, 0.0
    %130 = vadd.xlane.f32.xlu0 %v129
    %v131 = vpop.xlane.xlu0 %130
    %v132 = vsel %vm95, %v75, 0.0
    %133 = vadd.xlane.f32.xlu0 %v132
    %v134 = vpop.xlane.xlu0 %133
    %v135 = vsel %vm95, %v76, 0.0
    %136 = vadd.xlane.f32.xlu0 %v135
    %v137 = vpop.xlane.xlu0 %136
    %v138 = vsel %vm95, %v77, 0.0
    %139 = vadd.xlane.f32.xlu0 %v138
    %v140 = vpop.xlane.xlu0 %139
    %v141 = vsel %vm95, %v78, 0.0
    %142 = vadd.xlane.f32.xlu0 %v141
    %v143 = vpop.xlane.xlu0 %142
    %v144 = vsel %vm95, %v79, 0.0
    %145 = vadd.xlane.f32.xlu0 %v144
    %v146 = vpop.xlane.xlu0 %145
    %v147 = vsel %vm95, %v80, 0.0
    %148 = vadd.xlane.f32.xlu0 %v147
    %v149 = vpop.xlane.xlu0 %148
    %v150 = vsel %vm95, %v81, 0.0
    %151 = vadd.xlane.f32.xlu0 %v150
    %v152 = vpop.xlane.xlu0 %151
    %v153 = vsel %vm95, %v82, 0.0
    %154 = vadd.xlane.f32.xlu0 %v153
    %v155 = vpop.xlane.xlu0 %154
    %v156 = vsel %vm95, %v83, 0.0
    %157 = vadd.xlane.f32.xlu0 %v156
    %v158 = vpop.xlane.xlu0 %157
    %v159 = vsel %vm95, %v84, 0.0
    %160 = vadd.xlane.f32.xlu0 %v159
    %v161 = vpop.xlane.xlu0 %160
    %v162 = vsel %vm95, %v85, 0.0
    %163 = vadd.xlane.f32.xlu0 %v162
    %v164 = vpop.xlane.xlu0 %163
    %v165 = vsel %vm95, %v86, 0.0
    %166 = vadd.xlane.f32.xlu0 %v165
    %v167 = vpop.xlane.xlu0 %166
    %v168 = vsel %vm95, %v87, 0.0
    %169 = vadd.xlane.f32.xlu0 %v168
    %v170 = vpop.xlane.xlu0 %169
    %v171 = vsel %vm95, %v88, 0.0
    %172 = vadd.xlane.f32.xlu0 %v171
    %v173 = vpop.xlane.xlu0 %172
    %v174 = vsel %vm95, %v89, 0.0
    %175 = vadd.xlane.f32.xlu0 %v174
    %v176 = vpop.xlane.xlu0 %175
    %v177 = vsel %vm95, %v90, 0.0
    %178 = vadd.xlane.f32.xlu0 %v177
    %v179 = vpop.xlane.xlu0 %178
    %v180 = vsel %vm95, %v91, 0.0
    %181 = vadd.xlane.f32.xlu0 %v180
    %v182 = vpop.xlane.xlu0 %181
    %v183 = vsel %vm95, %v92, 0.0
    %184 = vadd.xlane.f32.xlu0 %v183
    %v185 = vpop.xlane.xlu0 %184
    %v186 = vsel %vm95, %v93, 0.0
    %187 = vadd.xlane.f32.xlu0 %v186
    %v188 = vpop.xlane.xlu0 %187
    %v189 = vsel %vm95, %v94, 0.0
    %190 = vadd.xlane.f32.xlu0 %v189
    %v191 = vpop.xlane.xlu0 %190
    %v192 = vld [vmem:[%s2] sm:$0x1]
    %v194 = vsel %vm95, %v15, 0
    %v197 = vsel %vm95, %v16, 0
    %v200 = vsel %vm95, %v17, 0
    %v203 = vsel %vm95, %v18, 0
    %v206 = vsel %vm95, %v19, 0
    %v209 = vsel %vm95, %v20, 0
    %v212 = vsel %vm95, %v21, 0
    %v215 = vsel %vm95, %v22, 0
    %v218 = vsel %vm95, %v23, 0
    %v221 = vsel %vm95, %v24, 0
    %v224 = vsel %vm95, %v25, 0
    %v227 = vsel %vm95, %v26, 0
    %v230 = vsel %vm95, %v27, 0
    %v233 = vsel %vm95, %v28, 0
    %v236 = vsel %vm95, %v29, 0
    %v239 = vsel %vm95, %v30, 0
    %v242 = vsel %vm95, %v31, 0
    %v245 = vsel %vm95, %v32, 0
    %v248 = vsel %vm95, %v33, 0
    %v251 = vsel %vm95, %v34, 0
    %v254 = vsel %vm95, %v35, 0
    %v257 = vsel %vm95, %v36, 0
    %v260 = vsel %vm95, %v37, 0
    %v263 = vsel %vm95, %v38, 0
    %v266 = vsel %vm95, %v39, 0
    %v269 = vsel %vm95, %v40, 0
    %v272 = vsel %vm95, %v41, 0
    %v275 = vsel %vm95, %v42, 0
    %v278 = vsel %vm95, %v43, 0
    %v281 = vsel %vm95, %v44, 0
    %v284 = vsel %vm95, %v45, 0
    %v287 = vsel %vm95, %v46, 0
    %v290 = vsel %vm95, %v47, 0
    %v293 = vsel %vm95, %v48, 0
    %v296 = vsel %vm95, %v49, 0
    %v299 = vsel %vm95, %v50, 0
    %v302 = vsel %vm95, %v51, 0
    %v305 = vsel %vm95, %v52, 0
    %v308 = vsel %vm95, %v53, 0
    %v311 = vsel %vm95, %v54, 0
    %v314 = vsel %vm95, %v55, 0
    %v317 = vsel %vm95, %v56, 0
    %v320 = vsel %vm95, %v57, 0
    %v323 = vsel %vm95, %v58, 0
    %v326 = vsel %vm95, %v59, 0
    %v329 = vsel %vm95, %v60, 0
    %v332 = vsel %vm95, %v61, 0
    %v335 = vsel %vm95, %v62, 0
    %337 = vmatprep.subr.mxu0 0.0
    %338 = vmatpush1.xpose.msra.mxu0 %v290
    %339 = vmatprep.subr.mxu0 0.0
    %340 = vmatpush1.xpose.msra.mxu0 %v293
    %341 = vmatprep.subr.mxu0 0.0
    %342 = vmatpush1.xpose.msra.mxu0 %v296
    %343 = vmatprep.subr.mxu0 0.0
    %344 = vmatpush1.xpose.msra.mxu0 %v299
    %345 = vmatprep.subr.mxu0 0.0
    %346 = vmatpush1.xpose.msra.mxu0 %v302
    %347 = vmatprep.subr.mxu0 0.0
    %348 = vmatpush1.xpose.msra.mxu0 %v305
    %349 = vmatprep.subr.mxu0 0.0
    %350 = vmatpush1.xpose.msra.mxu0 %v308
    %351 = vmatprep.subr.mxu0 0.0
    %352 = vmatpush1.xpose.msra.mxu0 %v311
    %353 = vmatprep.subr.mxu0 0.0
    %354 = vmatpush1.xpose.msra.mxu0 %v314
    %355 = vmatprep.subr.mxu0 0.0
    %356 = vmatpush1.xpose.msra.mxu0 %v317
    %357 = vmatprep.subr.mxu0 0.0
    %358 = vmatpush1.xpose.msra.mxu0 %v320
    %359 = vmatprep.subr.mxu0 0.0
    %360 = vmatpush1.xpose.msra.mxu0 %v323
    %361 = vmatprep.subr.mxu0 0.0
    %362 = vmatpush1.xpose.msra.mxu0 %v326
    %363 = vmatprep.subr.mxu0 0.0
    %364 = vmatpush1.xpose.msra.mxu0 %v329
    %365 = vmatprep.subr.mxu0 0.0
    %366 = vmatpush1.xpose.msra.mxu0 %v332
    %367 = vmatprep.subr.mxu0 0.0
    %368 = vmatpush1.xpose.msra.mxu0 %v335
    %369 = vmatprep.subr.mxu0 0.0
    %370 = vmatpush1.xpose.msra.mxu0 0.0
    %371 = vmatprep.subr.mxu0 0.0
    %372 = vmatpush1.xpose.msra.mxu0 0.0
    %373 = vmatprep.subr.mxu0 0.0
    %374 = vmatpush1.xpose.msra.mxu0 0.0
    %375 = vmatprep.subr.mxu0 0.0
    %376 = vmatpush1.xpose.msra.mxu0 0.0
    %377 = vmatprep.subr.mxu0 0.0
    %378 = vmatpush1.xpose.msra.mxu0 0.0
    %379 = vmatprep.subr.mxu0 0.0
    %380 = vmatpush1.xpose.msra.mxu0 0.0
    %381 = vmatprep.subr.mxu0 0.0
    %382 = vmatpush1.xpose.msra.mxu0 0.0
    %383 = vmatprep.subr.mxu0 0.0
    %384 = vmatpush1.xpose.msra.mxu0 0.0
    %385 = vmatprep.subr.mxu0 0.0
    %386 = vmatpush1.xpose.msra.mxu0 0.0
    %387 = vmatprep.subr.mxu0 0.0
    %388 = vmatpush1.xpose.msra.mxu0 0.0
    %389 = vmatprep.subr.mxu0 0.0
    %390 = vmatpush1.xpose.msra.mxu0 0.0
    %391 = vmatprep.subr.mxu0 0.0
    %392 = vmatpush1.xpose.msra.mxu0 0.0
    %393 = vmatprep.subr.mxu0 0.0
    %394 = vmatpush1.xpose.msra.mxu0 0.0
    %395 = vmatprep.subr.mxu0 0.0
    %396 = vmatpush1.xpose.msra.mxu0 0.0
    %397 = vmatprep.subr.mxu0 0.0
    %398 = vmatpush1.xpose.msra.mxu0 0.0
    %399 = vmatprep.subr.mxu0 0.0
    %400 = vmatpush1.xpose.msra.mxu0 0.0
    %401 = vmatprep.mubr.f32.mxu0 0.0
    %402 = vmatmul.mubr.f32.gmra.mrb[0].mxu0 %v194
    %v403 = vpop.f32.mrb[0].mxu0
    %v404 = vadd.f32 0.0, %v403
    %v405 = vpop.f32.mrb[0].mxu0
    %406 = vmatprep.mubr.f32.mxu0 0.0
    %407 = vmatmul.mubr.f32.gmra.mrb[0].mxu0 %v197
    %v408 = vpop.f32.mrb[0].mxu0
    %v409 = vadd.f32 0.0, %v408
    %v410 = vpop.f32.mrb[0].mxu0
    %411 = vmatprep.mubr.f32.mxu0 0.0
    %412 = vmatmul.mubr.f32.gmra.mrb[0].mxu0 %v200
    %v413 = vpop.f32.mrb[0].mxu0
    %v414 = vadd.f32 0.0, %v413
    %v415 = vpop.f32.mrb[0].mxu0
    %416 = vmatprep.mubr.f32.mxu0 0.0
    %417 = vmatmul.mubr.f32.gmra.mrb[0].mxu0 %v203
    %v418 = vpop.f32.mrb[0].mxu0
    %v419 = vadd.f32 0.0, %v418
    %v420 = vpop.f32.mrb[0].mxu0
    %421 = vmatprep.mubr.f32.mxu0 0.0
    %422 = vmatmul.mubr.f32.gmra.mrb[0].mxu0 %v206
    %v423 = vpop.f32.mrb[0].mxu0
    %v424 = vadd.f32 0.0, %v423
    %v425 = vpop.f32.mrb[0].mxu0
    %426 = vmatprep.mubr.f32.mxu0 0.0
    %427 = vmatmul.mubr.f32.gmra.mrb[0].mxu0 %v209
    %v428 = vpop.f32.mrb[0].mxu0
    %v429 = vadd.f32 0.0, %v428
    %v430 = vpop.f32.mrb[0].mxu0
    %431 = vmatprep.mubr.f32.mxu0 0.0
    %432 = vmatmul.mubr.f32.gmra.mrb[0].mxu0 %v212
    %v433 = vpop.f32.mrb[0].mxu0
    %v434 = vadd.f32 0.0, %v433
    %v435 = vpop.f32.mrb[0].mxu0
    %436 = vmatprep.mubr.f32.mxu0 0.0
    %437 = vmatmul.mubr.f32.gmra.mrb[0].mxu0 %v215
    %v438 = vpop.f32.mrb[0].mxu0
    %v439 = vadd.f32 0.0, %v438
    %v440 = vpop.f32.mrb[0].mxu0
    %441 = vmatprep.mubr.f32.mxu0 0.0
    %442 = vmatmul.mubr.f32.gmra.mrb[0].mxu0 %v218
    %v443 = vpop.f32.mrb[0].mxu0
    %v444 = vadd.f32 0.0, %v443
    %v445 = vpop.f32.mrb[0].mxu0
    %446 = vmatprep.mubr.f32.mxu0 0.0
    %447 = vmatmul.mubr.f32.gmra.mrb[0].mxu0 %v221
    %v448 = vpop.f32.mrb[0].mxu0
    %v449 = vadd.f32 0.0, %v448
    %v450 = vpop.f32.mrb[0].mxu0
    %451 = vmatprep.mubr.f32.mxu0 0.0
    %452 = vmatmul.mubr.f32.gmra.mrb[0].mxu0 %v224
    %v453 = vpop.f32.mrb[0].mxu0
    %v454 = vadd.f32 0.0, %v453
    %v455 = vpop.f32.mrb[0].mxu0
    %456 = vmatprep.mubr.f32.mxu0 0.0
    %457 = vmatmul.mubr.f32.gmra.mrb[0].mxu0 %v227
    %v458 = vpop.f32.mrb[0].mxu0
    %v459 = vadd.f32 0.0, %v458
    %v460 = vpop.f32.mrb[0].mxu0
    %461 = vmatprep.mubr.f32.mxu0 0.0
    %462 = vmatmul.mubr.f32.gmra.mrb[0].mxu0 %v230
    %v463 = vpop.f32.mrb[0].mxu0
    %v464 = vadd.f32 0.0, %v463
    %v465 = vpop.f32.mrb[0].mxu0
    %466 = vmatprep.mubr.f32.mxu0 0.0
    %467 = vmatmul.mubr.f32.gmra.mrb[0].mxu0 %v233
    %v468 = vpop.f32.mrb[0].mxu0
    %v469 = vadd.f32 0.0, %v468
    %v470 = vpop.f32.mrb[0].mxu0
    %471 = vmatprep.mubr.f32.mxu0 0.0
    %472 = vmatmul.mubr.f32.gmra.mrb[0].mxu0 %v236
    %v473 = vpop.f32.mrb[0].mxu0
    %v474 = vadd.f32 0.0, %v473
    %v475 = vpop.f32.mrb[0].mxu0
    %476 = vmatprep.mubr.f32.mxu0 0.0
    %477 = vmatmul.mubr.f32.gmra.mrb[0].mxu0 %v239
    %v478 = vpop.f32.mrb[0].mxu0
    %v479 = vadd.f32 0.0, %v478
    %v480 = vpop.f32.mrb[0].mxu0
    %481 = vmatprep.mubr.f32.mxu0 0.0
    %482 = vmatmul.mubr.f32.gmra.mrb[0].mxu0 %v242
    %v483 = vpop.f32.mrb[0].mxu0
    %v484 = vadd.f32 0.0, %v483
    %v485 = vpop.f32.mrb[0].mxu0
    %486 = vmatprep.mubr.f32.mxu0 0.0
    %487 = vmatmul.mubr.f32.gmra.mrb[0].mxu0 %v245
    %v488 = vpop.f32.mrb[0].mxu0
    %v489 = vadd.f32 0.0, %v488
    %v490 = vpop.f32.mrb[0].mxu0
    %491 = vmatprep.mubr.f32.mxu0 0.0
    %492 = vmatmul.mubr.f32.gmra.mrb[0].mxu0 %v248
    %v493 = vpop.f32.mrb[0].mxu0
    %v494 = vadd.f32 0.0, %v493
    %v495 = vpop.f32.mrb[0].mxu0
    %496 = vmatprep.mubr.f32.mxu0 0.0
    %497 = vmatmul.mubr.f32.gmra.mrb[0].mxu0 %v251
    %v498 = vpop.f32.mrb[0].mxu0
    %v499 = vadd.f32 0.0, %v498
    %v500 = vpop.f32.mrb[0].mxu0
    %501 = vmatprep.mubr.f32.mxu0 0.0
    %502 = vmatmul.mubr.f32.gmra.mrb[0].mxu0 %v254
    %v503 = vpop.f32.mrb[0].mxu0
    %v504 = vadd.f32 0.0, %v503
    %v505 = vpop.f32.mrb[0].mxu0
    %506 = vmatprep.mubr.f32.mxu0 0.0
    %507 = vmatmul.mubr.f32.gmra.mrb[0].mxu0 %v257
    %v508 = vpop.f32.mrb[0].mxu0
    %v509 = vadd.f32 0.0, %v508
    %v510 = vpop.f32.mrb[0].mxu0
    %511 = vmatprep.mubr.f32.mxu0 0.0
    %512 = vmatmul.mubr.f32.gmra.mrb[0].mxu0 %v260
    %v513 = vpop.f32.mrb[0].mxu0
    %v514 = vadd.f32 0.0, %v513
    %v515 = vpop.f32.mrb[0].mxu0
    %516 = vmatprep.mubr.f32.mxu0 0.0
    %517 = vmatmul.mubr.f32.gmra.mrb[0].mxu0 %v263
    %v518 = vpop.f32.mrb[0].mxu0
    %v519 = vadd.f32 0.0, %v518
    %v520 = vpop.f32.mrb[0].mxu0
    %521 = vmatprep.mubr.f32.mxu0 0.0
    %522 = vmatmul.mubr.f32.gmra.mrb[0].mxu0 %v266
    %v523 = vpop.f32.mrb[0].mxu0
    %v524 = vadd.f32 0.0, %v523
    %v525 = vpop.f32.mrb[0].mxu0
    %526 = vmatprep.mubr.f32.mxu0 0.0
    %527 = vmatmul.mubr.f32.gmra.mrb[0].mxu0 %v269
    %v528 = vpop.f32.mrb[0].mxu0
    %v529 = vadd.f32 0.0, %v528
    %v530 = vpop.f32.mrb[0].mxu0
    %531 = vmatprep.mubr.f32.mxu0 0.0
    %532 = vmatmul.mubr.f32.gmra.mrb[0].mxu0 %v272
    %v533 = vpop.f32.mrb[0].mxu0
    %v534 = vadd.f32 0.0, %v533
    %v535 = vpop.f32.mrb[0].mxu0
    %536 = vmatprep.mubr.f32.mxu0 0.0
    %537 = vmatmul.mubr.f32.gmra.mrb[0].mxu0 %v275
    %v538 = vpop.f32.mrb[0].mxu0
    %v539 = vadd.f32 0.0, %v538
    %v540 = vpop.f32.mrb[0].mxu0
    %541 = vmatprep.mubr.f32.mxu0 0.0
    %542 = vmatmul.mubr.f32.gmra.mrb[0].mxu0 %v278
    %v543 = vpop.f32.mrb[0].mxu0
    %v544 = vadd.f32 0.0, %v543
    %v545 = vpop.f32.mrb[0].mxu0
    %546 = vmatprep.mubr.f32.mxu0 0.0
    %547 = vmatmul.mubr.f32.gmra.mrb[0].mxu0 %v281
    %v548 = vpop.f32.mrb[0].mxu0
    %v549 = vadd.f32 0.0, %v548
    %v550 = vpop.f32.mrb[0].mxu0
    %551 = vmatprep.mubr.f32.mxu0 0.0
    %552 = vmatmul.mubr.f32.gmra.mrb[0].mxu0 %v284
    %v553 = vpop.f32.mrb[0].mxu0
    %v554 = vadd.f32 0.0, %v553
    %v555 = vpop.f32.mrb[0].mxu0
    %556 = vmatprep.mubr.f32.mxu0 0.0
    %557 = vmatmul.mubr.f32.gmra.mrb[0].mxu0 %v287
    %v558 = vpop.f32.mrb[0].mxu0
    %v559 = vadd.f32 0.0, %v558
    %v560 = vpop.f32.mrb[0].mxu0
    %561 = vdwg.mxu0
    %v563 = vlaneseq
    %v564 = vshrl.u32 %v563, 7
    %v565 = vsub.s32 0, %v564
    %v566 = vrot.slane %v192, %v565
    %v568 = vadd.f32 %v98, %v566
    %v569 = vadd.f32 %v101, %v566
    %v570 = vadd.f32 %v104, %v566
    %v571 = vadd.f32 %v107, %v566
    %v572 = vadd.f32 %v110, %v566
    %v573 = vadd.f32 %v113, %v566
    %v574 = vadd.f32 %v116, %v566
    %v575 = vadd.f32 %v119, %v566
    %v576 = vadd.f32 %v122, %v566
    %v577 = vadd.f32 %v125, %v566
    %v578 = vadd.f32 %v128, %v566
    %v579 = vadd.f32 %v131, %v566
    %v580 = vadd.f32 %v134, %v566
    %v581 = vadd.f32 %v137, %v566
    %v582 = vadd.f32 %v140, %v566
    %v583 = vadd.f32 %v143, %v566
    %v584 = vadd.f32 %v146, %v566
    %v585 = vadd.f32 %v149, %v566
    %v586 = vadd.f32 %v152, %v566
    %v587 = vadd.f32 %v155, %v566
    %v588 = vadd.f32 %v158, %v566
    %v589 = vadd.f32 %v161, %v566
    %v590 = vadd.f32 %v164, %v566
    %v591 = vadd.f32 %v167, %v566
    %v592 = vadd.f32 %v170, %v566
    %v593 = vadd.f32 %v173, %v566
    %v594 = vadd.f32 %v176, %v566
    %v595 = vadd.f32 %v179, %v566
    %v596 = vadd.f32 %v182, %v566
    %v597 = vadd.f32 %v185, %v566
    %v598 = vadd.f32 %v188, %v566
    %v599 = vadd.f32 %v191, %v566
    %v600 = vmul.f32 %v404, 2.0
    %v601 = vmul.f32 %v409, 2.0
    %v602 = vmul.f32 %v414, 2.0
    %v603 = vmul.f32 %v419, 2.0
    %v604 = vmul.f32 %v424, 2.0
    %v605 = vmul.f32 %v429, 2.0
    %v606 = vmul.f32 %v434, 2.0
    %v607 = vmul.f32 %v439, 2.0
    %v608 = vmul.f32 %v444, 2.0
    %v609 = vmul.f32 %v449, 2.0
    %v610 = vmul.f32 %v454, 2.0
    %v611 = vmul.f32 %v459, 2.0
    %v612 = vmul.f32 %v464, 2.0
    %v613 = vmul.f32 %v469, 2.0
    %v614 = vmul.f32 %v474, 2.0
    %v615 = vmul.f32 %v479, 2.0
    %v616 = vmul.f32 %v484, 2.0
    %v617 = vmul.f32 %v489, 2.0
    %v618 = vmul.f32 %v494, 2.0
    %v619 = vmul.f32 %v499, 2.0
    %v620 = vmul.f32 %v504, 2.0
    %v621 = vmul.f32 %v509, 2.0
    %v622 = vmul.f32 %v514, 2.0
    %v623 = vmul.f32 %v519, 2.0
    %v624 = vmul.f32 %v524, 2.0
    %v625 = vmul.f32 %v529, 2.0
    %v626 = vmul.f32 %v534, 2.0
    %v627 = vmul.f32 %v539, 2.0
    %v628 = vmul.f32 %v544, 2.0
    %v629 = vmul.f32 %v549, 2.0
    %v630 = vmul.f32 %v554, 2.0
    %v631 = vmul.f32 %v559, 2.0
    %v632 = vsub.f32 %v568, %v600
    %v633 = vsub.f32 %v569, %v601
    %v634 = vsub.f32 %v570, %v602
    %v635 = vsub.f32 %v571, %v603
    %v636 = vsub.f32 %v572, %v604
    %v637 = vsub.f32 %v573, %v605
    %v638 = vsub.f32 %v574, %v606
    %v639 = vsub.f32 %v575, %v607
    %v640 = vsub.f32 %v576, %v608
    %v641 = vsub.f32 %v577, %v609
    %v642 = vsub.f32 %v578, %v610
    %v643 = vsub.f32 %v579, %v611
    %v644 = vsub.f32 %v580, %v612
    %v645 = vsub.f32 %v581, %v613
    %v646 = vsub.f32 %v582, %v614
    %v647 = vsub.f32 %v583, %v615
    %v648 = vsub.f32 %v584, %v616
    %v649 = vsub.f32 %v585, %v617
    %v650 = vsub.f32 %v586, %v618
    %v651 = vsub.f32 %v587, %v619
    %v652 = vsub.f32 %v588, %v620
    %v653 = vsub.f32 %v589, %v621
    %v654 = vsub.f32 %v590, %v622
    %v655 = vsub.f32 %v591, %v623
    %v656 = vsub.f32 %v592, %v624
    %v657 = vsub.f32 %v593, %v625
    %v658 = vsub.f32 %v594, %v626
    %v659 = vsub.f32 %v595, %v627
    %v660 = vsub.f32 %v596, %v628
    %v661 = vsub.f32 %v597, %v629
    %v662 = vsub.f32 %v598, %v630
    %v663 = vsub.f32 %v599, %v631
    %v664 = vmax.f32 %v632, 0.0
    %v665 = vmax.f32 %v633, 0.0
    %v666 = vmax.f32 %v634, 0.0
    %v667 = vmax.f32 %v635, 0.0
    %v668 = vmax.f32 %v636, 0.0
    %v669 = vmax.f32 %v637, 0.0
    %v670 = vmax.f32 %v638, 0.0
    %v671 = vmax.f32 %v639, 0.0
    %v672 = vmax.f32 %v640, 0.0
    %v673 = vmax.f32 %v641, 0.0
    %v674 = vmax.f32 %v642, 0.0
    %v675 = vmax.f32 %v643, 0.0
    %v676 = vmax.f32 %v644, 0.0
    %v677 = vmax.f32 %v645, 0.0
    %v678 = vmax.f32 %v646, 0.0
    %v679 = vmax.f32 %v647, 0.0
    %v680 = vmax.f32 %v648, 0.0
    %v681 = vmax.f32 %v649, 0.0
    %v682 = vmax.f32 %v650, 0.0
    %v683 = vmax.f32 %v651, 0.0
    %v684 = vmax.f32 %v652, 0.0
    %v685 = vmax.f32 %v653, 0.0
    %v686 = vmax.f32 %v654, 0.0
    %v687 = vmax.f32 %v655, 0.0
    %v688 = vmax.f32 %v656, 0.0
    %v689 = vmax.f32 %v657, 0.0
    %v690 = vmax.f32 %v658, 0.0
    %v691 = vmax.f32 %v659, 0.0
    %v692 = vmax.f32 %v660, 0.0
    %v693 = vmax.f32 %v661, 0.0
    %v694 = vmax.f32 %v662, 0.0
    %v695 = vmax.f32 %v663, 0.0
    %v696 = vadd.f32 %v664, 1.0
    %v697 = vadd.f32 %v665, 1.0
    %v698 = vadd.f32 %v666, 1.0
    %v699 = vadd.f32 %v667, 1.0
    %v700 = vadd.f32 %v668, 1.0
    %v701 = vadd.f32 %v669, 1.0
    %v702 = vadd.f32 %v670, 1.0
    %v703 = vadd.f32 %v671, 1.0
    %v704 = vadd.f32 %v672, 1.0
    %v705 = vadd.f32 %v673, 1.0
    %v706 = vadd.f32 %v674, 1.0
    %v707 = vadd.f32 %v675, 1.0
    %v708 = vadd.f32 %v676, 1.0
    %v709 = vadd.f32 %v677, 1.0
    %v710 = vadd.f32 %v678, 1.0
    %v711 = vadd.f32 %v679, 1.0
    %v712 = vadd.f32 %v680, 1.0
    %v713 = vadd.f32 %v681, 1.0
    %v714 = vadd.f32 %v682, 1.0
    %v715 = vadd.f32 %v683, 1.0
    %v716 = vadd.f32 %v684, 1.0
    %v717 = vadd.f32 %v685, 1.0
    %v718 = vadd.f32 %v686, 1.0
    %v719 = vadd.f32 %v687, 1.0
    %v720 = vadd.f32 %v688, 1.0
    %v721 = vadd.f32 %v689, 1.0
    %v722 = vadd.f32 %v690, 1.0
    %v723 = vadd.f32 %v691, 1.0
    %v724 = vadd.f32 %v692, 1.0
    %v725 = vadd.f32 %v693, 1.0
    %v726 = vadd.f32 %v694, 1.0
    %v727 = vadd.f32 %v695, 1.0
    %v728 = vrcp.pop %v696
    %v729 = vrcp.pop %v697
    %v730 = vrcp.pop %v698
    %v731 = vrcp.pop %v699
    %v732 = vrcp.pop %v700
    %v733 = vrcp.pop %v701
    %v734 = vrcp.pop %v702
    %v735 = vrcp.pop %v703
    %v736 = vrcp.pop %v704
    %v737 = vrcp.pop %v705
    %v738 = vrcp.pop %v706
    %v739 = vrcp.pop %v707
    %v740 = vrcp.pop %v708
    %v741 = vrcp.pop %v709
    %v742 = vrcp.pop %v710
    %v743 = vrcp.pop %v711
    %v744 = vrcp.pop %v712
    %v745 = vrcp.pop %v713
    %v746 = vrcp.pop %v714
    %v747 = vrcp.pop %v715
    %v748 = vrcp.pop %v716
    %v749 = vrcp.pop %v717
    %v750 = vrcp.pop %v718
    %v751 = vrcp.pop %v719
    %v752 = vrcp.pop %v720
    %v753 = vrcp.pop %v721
    %v754 = vrcp.pop %v722
    %v755 = vrcp.pop %v723
    %v756 = vrcp.pop %v724
    %v757 = vrcp.pop %v725
    %v758 = vrcp.pop %v726
    %v759 = vrcp.pop %v727
    %v760 = vlaneseq
    %v761 = vand.u32 %v760, 127
    %vm762 = vcmp.lt.s32.totalorder %v761, 6
    %v763 = vsel %vm762, %v728, 0.0
    %v764 = vsel %vm762, %v729, 0.0
    %v765 = vsel %vm762, %v730, 0.0
    %v766 = vsel %vm762, %v731, 0.0
    %v767 = vsel %vm762, %v732, 0.0
    %v768 = vsel %vm762, %v733, 0.0
    %v769 = vsel %vm762, %v734, 0.0
    %v770 = vsel %vm762, %v735, 0.0
    %v771 = vsel %vm762, %v736, 0.0
    %v772 = vsel %vm762, %v737, 0.0
    %v773 = vsel %vm762, %v738, 0.0
    %v774 = vsel %vm762, %v739, 0.0
    %v775 = vsel %vm762, %v740, 0.0
    %v776 = vsel %vm762, %v741, 0.0
    %v777 = vsel %vm762, %v742, 0.0
    %v778 = vsel %vm762, %v743, 0.0
    %v779 = vsel %vm762, %v744, 0.0
    %v780 = vsel %vm762, %v745, 0.0
    %v781 = vsel %vm762, %v746, 0.0
    %v782 = vsel %vm762, %v747, 0.0
    %v783 = vsel %vm762, %v748, 0.0
    %v784 = vsel %vm762, %v749, 0.0
    %v785 = vsel %vm762, %v750, 0.0
    %v786 = vsel %vm762, %v751, 0.0
    %v787 = vsel %vm762, %v752, 0.0
    %v788 = vsel %vm762, %v753, 0.0
    %v789 = vsel %vm762, %v754, 0.0
    %v790 = vsel %vm762, %v755, 0.0
    %v791 = vsel %vm762, %v756, 0.0
    %v792 = vsel %vm762, %v757, 0.0
    %v793 = vsel %vm762, %v758, 0.0
    %v794 = vsel %vm762, %v759, 0.0
    %795 = vadd.xlane.f32.xlu0 %v763
    %v796 = vpop.xlane.xlu0 %795
    %797 = vadd.xlane.f32.xlu0 %v764
    %v798 = vpop.xlane.xlu0 %797
    %799 = vadd.xlane.f32.xlu0 %v765
    %v800 = vpop.xlane.xlu0 %799
    %801 = vadd.xlane.f32.xlu0 %v766
    %v802 = vpop.xlane.xlu0 %801
    %803 = vadd.xlane.f32.xlu0 %v767
    %v804 = vpop.xlane.xlu0 %803
    %805 = vadd.xlane.f32.xlu0 %v768
    %v806 = vpop.xlane.xlu0 %805
    %807 = vadd.xlane.f32.xlu0 %v769
    %v808 = vpop.xlane.xlu0 %807
    %809 = vadd.xlane.f32.xlu0 %v770
    %v810 = vpop.xlane.xlu0 %809
    %811 = vadd.xlane.f32.xlu0 %v771
    %v812 = vpop.xlane.xlu0 %811
    %813 = vadd.xlane.f32.xlu0 %v772
    %v814 = vpop.xlane.xlu0 %813
    %815 = vadd.xlane.f32.xlu0 %v773
    %v816 = vpop.xlane.xlu0 %815
    %817 = vadd.xlane.f32.xlu0 %v774
    %v818 = vpop.xlane.xlu0 %817
    %819 = vadd.xlane.f32.xlu0 %v775
    %v820 = vpop.xlane.xlu0 %819
    %821 = vadd.xlane.f32.xlu0 %v776
    %v822 = vpop.xlane.xlu0 %821
    %823 = vadd.xlane.f32.xlu0 %v777
    %v824 = vpop.xlane.xlu0 %823
    %825 = vadd.xlane.f32.xlu0 %v778
    %v826 = vpop.xlane.xlu0 %825
    %827 = vadd.xlane.f32.xlu0 %v779
    %v828 = vpop.xlane.xlu0 %827
    %829 = vadd.xlane.f32.xlu0 %v780
    %v830 = vpop.xlane.xlu0 %829
    %831 = vadd.xlane.f32.xlu0 %v781
    %v832 = vpop.xlane.xlu0 %831
    %833 = vadd.xlane.f32.xlu0 %v782
    %v834 = vpop.xlane.xlu0 %833
    %835 = vadd.xlane.f32.xlu0 %v783
    %v836 = vpop.xlane.xlu0 %835
    %837 = vadd.xlane.f32.xlu0 %v784
    %v838 = vpop.xlane.xlu0 %837
    %839 = vadd.xlane.f32.xlu0 %v785
    %v840 = vpop.xlane.xlu0 %839
    %841 = vadd.xlane.f32.xlu0 %v786
    %v842 = vpop.xlane.xlu0 %841
    %843 = vadd.xlane.f32.xlu0 %v787
    %v844 = vpop.xlane.xlu0 %843
    %845 = vadd.xlane.f32.xlu0 %v788
    %v846 = vpop.xlane.xlu0 %845
    %847 = vadd.xlane.f32.xlu0 %v789
    %v848 = vpop.xlane.xlu0 %847
    %849 = vadd.xlane.f32.xlu0 %v790
    %v850 = vpop.xlane.xlu0 %849
    %851 = vadd.xlane.f32.xlu0 %v791
    %v852 = vpop.xlane.xlu0 %851
    %853 = vadd.xlane.f32.xlu0 %v792
    %v854 = vpop.xlane.xlu0 %853
    %855 = vadd.xlane.f32.xlu0 %v793
    %v856 = vpop.xlane.xlu0 %855
    %857 = vadd.xlane.f32.xlu0 %v794
    %v858 = vpop.xlane.xlu0 %857
    %v859 = vrcp.pop %v796
    %v860 = vrcp.pop %v798
    %v861 = vrcp.pop %v800
    %v862 = vrcp.pop %v802
    %v863 = vrcp.pop %v804
    %v864 = vrcp.pop %v806
    %v865 = vrcp.pop %v808
    %v866 = vrcp.pop %v810
    %v867 = vrcp.pop %v812
    %v868 = vrcp.pop %v814
    %v869 = vrcp.pop %v816
    %v870 = vrcp.pop %v818
    %v871 = vrcp.pop %v820
    %v872 = vrcp.pop %v822
    %v873 = vrcp.pop %v824
    %v874 = vrcp.pop %v826
    %v875 = vrcp.pop %v828
    %v876 = vrcp.pop %v830
    %v877 = vrcp.pop %v832
    %v878 = vrcp.pop %v834
    %v879 = vrcp.pop %v836
    %v880 = vrcp.pop %v838
    %v881 = vrcp.pop %v840
    %v882 = vrcp.pop %v842
    %v883 = vrcp.pop %v844
    %v884 = vrcp.pop %v846
    %v885 = vrcp.pop %v848
    %v886 = vrcp.pop %v850
    %v887 = vrcp.pop %v852
    %v888 = vrcp.pop %v854
    %v889 = vrcp.pop %v856
    %v890 = vrcp.pop %v858
    %v891 = vmul.f32 %v796, %v859
    %v892 = vmul.f32 %v798, %v860
    %v893 = vmul.f32 %v800, %v861
    %v894 = vmul.f32 %v802, %v862
    %v895 = vmul.f32 %v804, %v863
    %v896 = vmul.f32 %v806, %v864
    %v897 = vmul.f32 %v808, %v865
    %v898 = vmul.f32 %v810, %v866
    %v899 = vmul.f32 %v812, %v867
    %v900 = vmul.f32 %v814, %v868
    %v901 = vmul.f32 %v816, %v869
    %v902 = vmul.f32 %v818, %v870
    %v903 = vmul.f32 %v820, %v871
    %v904 = vmul.f32 %v822, %v872
    %v905 = vmul.f32 %v824, %v873
    %v906 = vmul.f32 %v826, %v874
    %v907 = vmul.f32 %v828, %v875
    %v908 = vmul.f32 %v830, %v876
    %v909 = vmul.f32 %v832, %v877
    %v910 = vmul.f32 %v834, %v878
    %v911 = vmul.f32 %v836, %v879
    %v912 = vmul.f32 %v838, %v880
    %v913 = vmul.f32 %v840, %v881
    %v914 = vmul.f32 %v842, %v882
    %v915 = vmul.f32 %v844, %v883
    %v916 = vmul.f32 %v846, %v884
    %v917 = vmul.f32 %v848, %v885
    %v918 = vmul.f32 %v850, %v886
    %v919 = vmul.f32 %v852, %v887
    %v920 = vmul.f32 %v854, %v888
    %v921 = vmul.f32 %v856, %v889
    %v922 = vmul.f32 %v858, %v890
    %v923 = vsub.f32 2.0, %v891
    %v924 = vsub.f32 2.0, %v892
    %v925 = vsub.f32 2.0, %v893
    %v926 = vsub.f32 2.0, %v894
    %v927 = vsub.f32 2.0, %v895
    %v928 = vsub.f32 2.0, %v896
    %v929 = vsub.f32 2.0, %v897
    %v930 = vsub.f32 2.0, %v898
    %v931 = vsub.f32 2.0, %v899
    %v932 = vsub.f32 2.0, %v900
    %v933 = vsub.f32 2.0, %v901
    %v934 = vsub.f32 2.0, %v902
    %v935 = vsub.f32 2.0, %v903
    %v936 = vsub.f32 2.0, %v904
    %v937 = vsub.f32 2.0, %v905
    %v938 = vsub.f32 2.0, %v906
    %v939 = vsub.f32 2.0, %v907
    %v940 = vsub.f32 2.0, %v908
    %v941 = vsub.f32 2.0, %v909
    %v942 = vsub.f32 2.0, %v910
    %v943 = vsub.f32 2.0, %v911
    %v944 = vsub.f32 2.0, %v912
    %v945 = vsub.f32 2.0, %v913
    %v946 = vsub.f32 2.0, %v914
    %v947 = vsub.f32 2.0, %v915
    %v948 = vsub.f32 2.0, %v916
    %v949 = vsub.f32 2.0, %v917
    %v950 = vsub.f32 2.0, %v918
    %v951 = vsub.f32 2.0, %v919
    %v952 = vsub.f32 2.0, %v920
    %v953 = vsub.f32 2.0, %v921
    %v954 = vsub.f32 2.0, %v922
    %v955 = vmul.f32 %v859, %v923
    %v956 = vmul.f32 %v860, %v924
    %v957 = vmul.f32 %v861, %v925
    %v958 = vmul.f32 %v862, %v926
    %v959 = vmul.f32 %v863, %v927
    %v960 = vmul.f32 %v864, %v928
    %v961 = vmul.f32 %v865, %v929
    %v962 = vmul.f32 %v866, %v930
    %v963 = vmul.f32 %v867, %v931
    %v964 = vmul.f32 %v868, %v932
    %v965 = vmul.f32 %v869, %v933
    %v966 = vmul.f32 %v870, %v934
    %v967 = vmul.f32 %v871, %v935
    %v968 = vmul.f32 %v872, %v936
    %v969 = vmul.f32 %v873, %v937
    %v970 = vmul.f32 %v874, %v938
    %v971 = vmul.f32 %v875, %v939
    %v972 = vmul.f32 %v876, %v940
    %v973 = vmul.f32 %v877, %v941
    %v974 = vmul.f32 %v878, %v942
    %v975 = vmul.f32 %v879, %v943
    %v976 = vmul.f32 %v880, %v944
    %v977 = vmul.f32 %v881, %v945
    %v978 = vmul.f32 %v882, %v946
    %v979 = vmul.f32 %v883, %v947
    %v980 = vmul.f32 %v884, %v948
    %v981 = vmul.f32 %v885, %v949
    %v982 = vmul.f32 %v886, %v950
    %v983 = vmul.f32 %v887, %v951
    %v984 = vmul.f32 %v888, %v952
    %v985 = vmul.f32 %v889, %v953
    %v986 = vmul.f32 %v890, %v954
    %v987 = vmul.f32 %v763, %v955
    %v988 = vmul.f32 %v764, %v956
    %v989 = vmul.f32 %v765, %v957
    %v990 = vmul.f32 %v766, %v958
    %v991 = vmul.f32 %v767, %v959
    %v992 = vmul.f32 %v768, %v960
    %v993 = vmul.f32 %v769, %v961
    %v994 = vmul.f32 %v770, %v962
    %v995 = vmul.f32 %v771, %v963
    %v996 = vmul.f32 %v772, %v964
    %v997 = vmul.f32 %v773, %v965
    %v998 = vmul.f32 %v774, %v966
    %v999 = vmul.f32 %v775, %v967
    %v1000 = vmul.f32 %v776, %v968
    %v1001 = vmul.f32 %v777, %v969
    %v1002 = vmul.f32 %v778, %v970
    %v1003 = vmul.f32 %v779, %v971
    %v1004 = vmul.f32 %v780, %v972
    %v1005 = vmul.f32 %v781, %v973
    %v1006 = vmul.f32 %v782, %v974
    %v1007 = vmul.f32 %v783, %v975
    %v1008 = vmul.f32 %v784, %v976
    %v1009 = vmul.f32 %v785, %v977
    %v1010 = vmul.f32 %v786, %v978
    %v1011 = vmul.f32 %v787, %v979
    %v1012 = vmul.f32 %v788, %v980
    %v1013 = vmul.f32 %v789, %v981
    %v1014 = vmul.f32 %v790, %v982
    %v1015 = vmul.f32 %v791, %v983
    %v1016 = vmul.f32 %v792, %v984
    %v1017 = vmul.f32 %v793, %v985
    %v1018 = vmul.f32 %v794, %v986
    %1019 = vst [vmem:[#allocation2] sm:$0xff] %v987
    %1020 = vst [vmem:[#allocation2 + $0x8] sm:$0xff] %v988
    %1021 = vst [vmem:[#allocation2 + $0x10] sm:$0xff] %v989
    %1022 = vst [vmem:[#allocation2 + $0x18] sm:$0xff] %v990
    %1023 = vst [vmem:[#allocation2 + $0x20] sm:$0xff] %v991
    %1024 = vst [vmem:[#allocation2 + $0x28] sm:$0xff] %v992
    %1025 = vst [vmem:[#allocation2 + $0x30] sm:$0xff] %v993
    %1026 = vst [vmem:[#allocation2 + $0x38] sm:$0xff] %v994
    %1027 = vst [vmem:[#allocation2 + $0x40] sm:$0xff] %v995
    %1028 = vst [vmem:[#allocation2 + $0x48] sm:$0xff] %v996
    %1029 = vst [vmem:[#allocation2 + $0x50] sm:$0xff] %v997
    %1030 = vst [vmem:[#allocation2 + $0x58] sm:$0xff] %v998
    %1031 = vst [vmem:[#allocation2 + $0x60] sm:$0xff] %v999
    %1032 = vst [vmem:[#allocation2 + $0x68] sm:$0xff] %v1000
    %1033 = vst [vmem:[#allocation2 + $0x70] sm:$0xff] %v1001
    %1034 = vst [vmem:[#allocation2 + $0x78] sm:$0xff] %v1002
    %1035 = vst [vmem:[#allocation2 + $0x80] sm:$0xff] %v1003
    %1036 = vst [vmem:[#allocation2 + $0x88] sm:$0xff] %v1004
    %1037 = vst [vmem:[#allocation2 + $0x90] sm:$0xff] %v1005
    %1038 = vst [vmem:[#allocation2 + $0x98] sm:$0xff] %v1006
    %1039 = vst [vmem:[#allocation2 + $0xa0] sm:$0xff] %v1007
    %1040 = vst [vmem:[#allocation2 + $0xa8] sm:$0xff] %v1008
    %1041 = vst [vmem:[#allocation2 + $0xb0] sm:$0xff] %v1009
    %1042 = vst [vmem:[#allocation2 + $0xb8] sm:$0xff] %v1010
    %1043 = vst [vmem:[#allocation2 + $0xc0] sm:$0xff] %v1011
    %1044 = vst [vmem:[#allocation2 + $0xc8] sm:$0xff] %v1012
    %1045 = vst [vmem:[#allocation2 + $0xd0] sm:$0xff] %v1013
    %1046 = vst [vmem:[#allocation2 + $0xd8] sm:$0xff] %v1014
    %1047 = vst [vmem:[#allocation2 + $0xe0] sm:$0xff] %v1015
    %1048 = vst [vmem:[#allocation2 + $0xe8] sm:$0xff] %v1016
    %1049 = vst [vmem:[#allocation2 + $0xf0] sm:$0xff] %v1017
    %1050 = vst [vmem:[#allocation2 + $0xf8] sm:$0xff] %v1018
    // Predicated region
    $region14: #{tpu_custom_call.1} parent=1 // pred_check
      _
    $region15: #{tpu_custom_call.1} parent=1 // pred_check_branch
      %1052 = sbr.rel (0) target = $region17
    $region16: #{tpu_custom_call.1} parent=1 // pred_region
      %s1054 = ssub.s32 4096, 4096
      %1055 = vsyncadd [#allocation3], %s1054
      %s1056 = sshll.u32 [#allocation2], 4
      %s1057 = int_to_ptr.vmem [resolvable:$true] %s1056
      %1062 = dma.vmem_to_hbm [thread:$0]  %s1057, 4096, %s3, [#allocation3], 128, 128, 8
    $region17: #{tpu_custom_call.1} parent=1 // pred_fallthru
      _
    // Predicated region
    $region18: #{tpu_custom_call.1} parent=1 // pred_check
      _
    $region19: #{tpu_custom_call.1} parent=1 // pred_check_branch
      %1064 = sbr.rel (0) target = $region21
    $region20: #{tpu_custom_call.1} parent=1 // pred_region
      %1065 = dma.done [#allocation3], 4096
    $region21: #{tpu_custom_call.1} parent=1 // pred_fallthru
      _
    %1066 = vsyncpa [#allocation3], 1

</llo_original>
